<compile_context>
chip_gen: v7x
topology: tpu7x:2x2x1
jax: 0.10.0
libtpu: 0.0.40
codegen_flags: <defaults>
</compile_context>

<pallas_src>
import jax
import jax.numpy as jnp
from jax.experimental import pallas as pl
from jax.experimental.pallas import tpu as pltpu


_BETA = 10.0
_TARGET_BLOCK_BYTES = 4 * 1024 * 1024          # ~4 MiB per block
_LANE_CANDIDATES = (4096, 2048, 1024, 512, 256, 128)   # prefer lane-dense slabs


def _swish_kernel(x_ref, o_ref):
    # Compute in f32 (beta=10 is steep), cast back to the I/O dtype.
    xf = x_ref[...].astype(jnp.float32)
    y = xf * jax.nn.sigmoid(_BETA * xf)
    o_ref[...] = y.astype(o_ref.dtype)


def swish(x: jax.Array) -> jax.Array:
    """y = x * sigmoid(10 * x), elementwise, any shape/dtype."""
    orig_shape = x.shape
    dtype = x.dtype
    n = x.size
    if n == 0:
        return x

    itemsize = jnp.dtype(dtype).itemsize

    # ---- choose a lane-dense 2-D layout (rows, lanes) ----------------------
    # Widest lane dim that divides n exactly -> no pad, no trailing slice.
    lanes = None
    for cand in _LANE_CANDIDATES:
        if n % cand == 0:
            lanes = cand
            break
    padded = lanes is None
    if padded:
        lanes = 128
        n_pad = pl.cdiv(n, lanes) * lanes
    else:
        n_pad = n

    x_flat = jnp.ravel(x)
    if padded:
        # swish(0) == 0, so zero padding is safe; sliced off at the end.
        x_flat = jnp.pad(x_flat, (0, n_pad - n))
    rows = n_pad // lanes
    x2d = x_flat.reshape(rows, lanes)

    # ---- block sizing -------------------------------------------------------
    # Target ~4 MiB blocks.  block_rows must be a multiple of 8 (sublane) or
    # equal to the full row count.  Ragged last block (rows % block_rows != 0)
    # is handled by Pallas' masked partial blocks - fine for elementwise.
    max_block_rows = max(8, (_TARGET_BLOCK_BYTES // (lanes * itemsize)) // 8 * 8)
    block_rows = rows if rows <= max_block_rows else max_block_rows
    grid = (pl.cdiv(rows, block_rows),)

    cost = pl.CostEstimate(
        flops=5 * n,
        transcendentals=n,
        bytes_accessed=2 * n * itemsize,
    )

    out = pl.pallas_call(
        _swish_kernel,
        out_shape=jax.ShapeDtypeStruct((rows, lanes), dtype),
        grid_spec=pltpu.PrefetchScalarGridSpec(
            num_scalar_prefetch=0,
            grid=grid,
            in_specs=[pl.BlockSpec((block_rows, lanes), lambda i: (i, 0))],
            out_specs=pl.BlockSpec((block_rows, lanes), lambda i: (i, 0)),
        ),
        compiler_params=pltpu.CompilerParams(
            dimension_semantics=("parallel",),      # lets v7x use both TCs
            vmem_limit_bytes=32 * 1024 * 1024,      # 4 x 4 MiB buffers + headroom,
                                                    # safe on v5e/v6e/v7x
        ),
        cost_estimate=cost,
    )(x2d)

    if padded:
        return out.reshape(-1)[:n].reshape(orig_shape)
    return out.reshape(orig_shape)


if __name__ == "__main__":
    key = jax.random.PRNGKey(0)
    x = jax.random.normal(key, (2, 4, 16, 16), dtype=jnp.float32)  # NCHW

    y = swish(x)
    y = jax.block_until_ready(y)

    y_ref = x * jax.nn.sigmoid(10.0 * x)
    assert y.shape == x.shape and y.dtype == x.dtype
    assert jnp.allclose(y, y_ref, atol=1e-6, rtol=1e-6)

    # Exercise the fallback path (size not divisible by 128 -> pad + slice).
    x2 = jax.random.normal(jax.random.PRNGKey(1), (3, 5, 7), dtype=jnp.float32)
    y2 = jax.block_until_ready(swish(x2))
    y2_ref = x2 * jax.nn.sigmoid(10.0 * x2)
    assert y2.shape == x2.shape and jnp.allclose(y2, y2_ref, atol=1e-6, rtol=1e-6)

    print("KERNEL_OK")
</pallas_src>

<mosaic_0001>
module attributes {stable_mosaic.version = 11 : i64} {
  func.func @_swish_kernel(%arg0: i32, %arg1: memref<1x2048xf32, #tpu.memory_space<vmem>>, %arg2: memref<1x2048xf32, #tpu.memory_space<vmem>>) attributes {dimension_semantics = [#tpu.dimension_semantics<parallel>], iteration_bounds = array<i64: 1>, scalar_prefetch = 0 : i64, scratch_operands = 0 : i64, tpu.core_type = #tpu.core_type<tc>, window_params = [{transform_indices = @transform_0, window_bounds = array<i64: 1, 2048>}, {transform_indices = @transform_1, window_bounds = array<i64: 1, 2048>}]} {
    %c0 = arith.constant 0 : index
    %c0_0 = arith.constant 0 : index
    %0 = vector.load %arg1[%c0, %c0_0] : memref<1x2048xf32, #tpu.memory_space<vmem>>, vector<1x2048xf32>
    %cst = arith.constant 1.000000e+01 : f32
    %1 = vector.broadcast %cst : f32 to vector<1x2048xf32>
    %2 = arith.mulf %1, %0 : vector<1x2048xf32>
    %3 = arith.negf %2 : vector<1x2048xf32>
    %4 = math.exp %3 : vector<1x2048xf32>
    %cst_1 = arith.constant 1.000000e+00 : f32
    %5 = vector.broadcast %cst_1 : f32 to vector<1x2048xf32>
    %6 = arith.addf %5, %4 : vector<1x2048xf32>
    %7 = arith.divf %5, %6 : vector<1x2048xf32>
    %8 = arith.mulf %0, %7 : vector<1x2048xf32>
    %c0_2 = arith.constant 0 : index
    %c0_3 = arith.constant 0 : index
    %9 = vector.load %arg2[%c0_2, %c0_3] : memref<1x2048xf32, #tpu.memory_space<vmem>>, vector<1x2048xf32>
    tpu.vector_store %arg2[%c0_2, %c0_3], %8 {strides = array<i32>} : memref<1x2048xf32, #tpu.memory_space<vmem>>, vector<1x2048xf32>,
    return
  }
  func.func @transform_0(%arg0: i32) -> (i32, i32) {
    %c0_i32 = arith.constant 0 : i32
    %c0_i32_0 = arith.constant 0 : i32
    return %arg0, %c0_i32 : i32, i32
  }
  func.func @transform_1(%arg0: i32) -> (i32, i32) {
    %c0_i32 = arith.constant 0 : i32
    %c0_i32_0 = arith.constant 0 : i32
    return %arg0, %c0_i32 : i32, i32
  }
}

</mosaic_0001>

<llo_original>
// kernel: tpu_custom_call.1
$region0: #{tpu_custom_call.1}
  #allocation0 [shape = 'u32[]', space=smem, size = 0x4, offset = 0x4, fixed_abs, tag = 'smem constant byte address 0x4 - core index']
  #allocation1 [shape = 'u32[144,128]{1,0:T(1,128)}', space=vmem, size = 0x12000, scoped, tag = 'internal scratch']
  %s0 = inlined_call_operand.hbm [shape: f32[1,2048], index: 0, kind: input, shape index: {}]
  %s1 = inlined_call_operand.hbm [shape: f32[1,2048], index: 1, kind: output, shape index: {}]
  %s2 = sld [smem:[#allocation0]]
  $region18: #{tpu_custom_call.1} parent=0
    _
  %s4 = ssub.s32 1, %s2
  %s5 = scalar_select 0, %s4, %s2
  $region1: #{tpu_custom_call.1} parent=0
    #allocation2 [shape = 'u8[8192]{0}', space=vmem, size = 0x2000, scoped, tag = 'input window, operand 0, single buffered']
    #allocation3 [shape = 's32[1]{0}', space=sflag, size = 0x4, scoped, tag = 'scoped memory for tpu_custom_call.1']
    #allocation4 [shape = 's32[1]{0}', space=sflag, size = 0x4, scoped, tag = 'scoped memory for tpu_custom_call.1']
    #allocation5 [shape = 'u8[8192]{0}', space=vmem, size = 0x2000, scoped, tag = 'output window, operand 0, single buffered']
    %6 = vsyncpa [#allocation3], 0
    %7 = vsyncpa [#allocation4], 0
    // Predicated region
    $region2: #{tpu_custom_call.1} parent=1 // pred_check
      _
    $region3: #{tpu_custom_call.1} parent=1 // pred_check_branch
      %9 = sbr.rel (0) target = $region5
    $region4: #{tpu_custom_call.1} parent=1 // pred_region
      %s11 = ssub.s32 256, 256
      %12 = vsyncadd [#allocation3], %s11
      %s14 = sshll.u32 [#allocation2], 4
      %s15 = int_to_ptr.vmem [resolvable:$true] %s14
      %17 = dma.hbm_to_vmem [thread:$0]  %s0, 256, %s15, [#allocation3]
    $region5: #{tpu_custom_call.1} parent=1 // pred_fallthru
      _
    // Predicated region
    $region6: #{tpu_custom_call.1} parent=1 // pred_check
      _
    $region7: #{tpu_custom_call.1} parent=1 // pred_check_branch
      %19 = sbr.rel (0) target = $region9
    $region8: #{tpu_custom_call.1} parent=1 // pred_region
      %20 = dma.done [#allocation3], 256
    $region9: #{tpu_custom_call.1} parent=1 // pred_fallthru
      _
    %v21 = vld [vmem:[#allocation2] sm:$0xff]
    %v22 = vld [vmem:[#allocation2 + $0x8] sm:$0xff]
    %v23 = vmul.f32 %v21, 10.0
    %v24 = vmul.f32 %v22, 10.0
    %v25 = vxor.u32 %v23, 2147483648
    %v26 = vxor.u32 %v24, 2147483648
    %v27 = vmul.f32 %v25, 1.442695
    %v28 = vpow.pop %v27
    %v29 = vmul.f32 %v26, 1.442695
    %v30 = vpow.pop %v29
    %v31 = vadd.f32 %v28, 1.0
    %v32 = vadd.f32 %v30, 1.0
    %v33 = vrcp.pop %v31
    %v34 = vmul.f32 1.0, %v33
    %v35 = vrcp.pop %v32
    %v36 = vmul.f32 1.0, %v35
    %v37 = vmul.f32 %v21, %v34
    %v38 = vmul.f32 %v22, %v36
    %39 = vst [vmem:[#allocation5] sm:$0xff] %v37
    %40 = vst [vmem:[#allocation5 + $0x8] sm:$0xff] %v38
    // Predicated region
    $region10: #{tpu_custom_call.1} parent=1 // pred_check
      _
    $region11: #{tpu_custom_call.1} parent=1 // pred_check_branch
      %42 = sbr.rel (0) target = $region13
    $region12: #{tpu_custom_call.1} parent=1 // pred_region
      %s44 = ssub.s32 256, 256
      %45 = vsyncadd [#allocation4], %s44
      %s47 = sshll.u32 [#allocation5], 4
      %s48 = int_to_ptr.vmem [resolvable:$true] %s47
      %50 = dma.vmem_to_hbm [thread:$0]  %s48, 256, %s1, [#allocation4]
    $region13: #{tpu_custom_call.1} parent=1 // pred_fallthru
      _
    // Predicated region
    $region14: #{tpu_custom_call.1} parent=1 // pred_check
      _
    $region15: #{tpu_custom_call.1} parent=1 // pred_check_branch
      %52 = sbr.rel (0) target = $region17
    $region16: #{tpu_custom_call.1} parent=1 // pred_region
      %53 = dma.done [#allocation4], 256
    $region17: #{tpu_custom_call.1} parent=1 // pred_fallthru
      _
    %54 = vsyncpa [#allocation3], 1
    %55 = vsyncpa [#allocation4], 1

</llo_original>
